<compile_context>
chip_gen: v7x
topology: tpu7x:2x2x1
jax: 0.10.0
libtpu: 0.0.40
codegen_flags: <defaults>
</compile_context>

<pallas_src>
import functools

import jax
import jax.numpy as jnp
from jax.experimental import pallas as pl
from jax.experimental.pallas import tpu as pltpu


def _round_up(x: int, m: int) -> int:
    return (x + m - 1) // m * m


# ---------------------------------------------------------------------------
# Per-generation VMEM budget.
# ---------------------------------------------------------------------------
@functools.lru_cache(maxsize=None)
def _vmem_budget_bytes() -> int:
    try:
        phys = int(pltpu.get_tpu_info().vmem_capacity_bytes)
    except Exception:  # pragma: no cover - fallback if the query is unavailable
        phys = 64 * 1024 * 1024  # conservative: v7x per-TensorCore VMEM
    # Leave ~25% headroom for compiler-internal scratch/semaphores and cap at
    # 96 MiB: v5e/v6e (128 MiB physical) -> 96 MiB, v7x (64 MiB) -> 48 MiB.
    return min(96 * 1024 * 1024, (phys // 4) * 3)


def _vmem_estimate_bytes(tile_b: int, D: int, H: int, params) -> int:
    """Scoped-VMEM estimate matching the BlockSpec buffering choices below."""
    w1, b1, w2, b2, w3_row, _ = params
    # Weights/biases: constant index_map + pl.Buffered(1) -> single copy.
    resident = (w1.size * w1.dtype.itemsize + w2.size * w2.dtype.itemsize
                + (b1.size + b2.size + w3_row.size) * 4)
    feat = 2 * tile_b * max(D, 128) * 2          # bf16 feature tile, double-buffered
    out = 2 * tile_b * 128 * 4                   # (tile_b,1) f32 tile pads to 128 lanes
    interm = 2 * tile_b * max(H, 128) * 4        # f32 h1/h2 intermediates
    return resident + feat + out + interm


def _choose_tile_b(B: int, tile_b: int, *, min_steps: int = 2) -> int:
    """Pick a sublane-aligned batch tile that gives >= min_steps grid steps."""
    tile_b = max(8, _round_up(int(tile_b), 8))
    if tile_b >= B:
        tile_b = _round_up(B, 8)                 # one block covering the whole batch
    # v7x has 2 TensorCores; a 1-step grid cannot be sharded by "parallel"
    # semantics.  Splitting is ~free on single-TC v5e/v6e.
    if pl.cdiv(B, tile_b) < min_steps and B > 8 * min_steps:
        tile_b = max(8, _round_up(pl.cdiv(B, min_steps), 8))
    return tile_b


# ---------------------------------------------------------------------------
# Gradient reverse layer: identity forward, -alpha * grad backward.
# ---------------------------------------------------------------------------
@jax.custom_vjp
def gradient_reverse(x, alpha):
    return x


def _grl_fwd(x, alpha):
    return x, alpha


def _grl_bwd(alpha, g):
    return ((-alpha * g).astype(g.dtype), jnp.zeros_like(alpha))


gradient_reverse.defvjp(_grl_fwd, _grl_bwd)


# ---------------------------------------------------------------------------
# Fused 3-layer discriminator kernel (one batch tile per grid step).
# ---------------------------------------------------------------------------
def _discriminator_kernel(f_ref, w1_ref, b1_ref, w2_ref, b2_ref, w3_ref, b3_ref,
                          d_ref):
    """ReLU(f W1 + b1) -> ReLU(. W2 + b2) -> sigmoid(. w3 + b3)."""
    f = f_ref[...]                               # bf16 (tile_b, D), no in-kernel cast
    h1 = jnp.dot(f, w1_ref[...], preferred_element_type=jnp.float32) + b1_ref[...]
    h1 = jnp.maximum(h1, 0.0)
    h2 = jnp.dot(h1.astype(jnp.bfloat16), w2_ref[...],
                 preferred_element_type=jnp.float32) + b2_ref[...]
    h2 = jnp.maximum(h2, 0.0)
    # Layer 3 (H -> 1): VPU multiply + XLU lane reduction with w3 as a (1, H)
    # row -- avoids a lane-sparse N=1 MXU matmul.
    logits = jnp.sum(h2 * w3_ref[...], axis=-1, keepdims=True) + b3_ref[0, 0]
    d_ref[...] = jax.nn.sigmoid(logits).astype(d_ref.dtype)


def run_discriminator(f, params, *, tile_b=512):
    """Run the fused discriminator on features f of shape (B, D) -> (B, 1)."""
    w1, b1, w2, b2, w3_row, b3 = params
    B, D = f.shape
    H = w1.shape[1]

    if f.dtype != jnp.bfloat16:
        # Only hit if the caller did not already supply bf16 features (the
        # DomainAdversarialLoss wrapper fuses this cast into the concat copy).
        f = f.astype(jnp.bfloat16)

    budget = _vmem_budget_bytes()
    tile_b = _choose_tile_b(B, tile_b)
    # Shrink the batch tile until the (properly double-buffer-aware) estimate
    # fits the per-generation VMEM budget.
    while tile_b > 8 and _vmem_estimate_bytes(tile_b, D, H, params) > budget:
        tile_b = max(8, _round_up(tile_b // 2, 8))
    if _vmem_estimate_bytes(tile_b, D, H, params) > budget:
        raise ValueError("discriminator weights do not fit the VMEM budget")

    # Partial last block (B % tile_b != 0) is handled by padded loads / masked
    # stores -- no jnp.pad + slice round trip through HBM.
    grid = (pl.cdiv(B, tile_b),)

    const2 = lambda i: (0, 0)
    # Constant-index weights/biases: single-buffered (one resident VMEM copy).
    single = pl.Buffered(1)
    grid_spec = pltpu.PrefetchScalarGridSpec(
        num_scalar_prefetch=0,
        grid=grid,
        in_specs=[
            # Features: default double-buffering; bump to pl.Buffered(3) only
            # if bundles show exposed feature DMA at large D.
            pl.BlockSpec((tile_b, D), lambda i: (i, 0)),
            pl.BlockSpec((D, H), const2, pipeline_mode=single),   # w1 (bf16)
            pl.BlockSpec((1, H), const2, pipeline_mode=single),   # b1 (f32)
            pl.BlockSpec((H, H), const2, pipeline_mode=single),   # w2 (bf16)
            pl.BlockSpec((1, H), const2, pipeline_mode=single),   # b2 (f32)
            pl.BlockSpec((1, H), const2, pipeline_mode=single),   # w3 row (f32)
            pl.BlockSpec(memory_space=pltpu.SMEM),                # b3 scalar
        ],
        out_specs=pl.BlockSpec((tile_b, 1), lambda i: (i, 0)),
    )

    return pl.pallas_call(
        _discriminator_kernel,
        out_shape=jax.ShapeDtypeStruct((B, 1), jnp.float32),
        grid_spec=grid_spec,
        compiler_params=pltpu.CompilerParams(
            dimension_semantics=("parallel",),
            vmem_limit_bytes=budget,
        ),
    )(f, w1, b1, w2, b2, w3_row, b3)


# ---------------------------------------------------------------------------
# DomainAdversarialLoss.forward equivalent.
# ---------------------------------------------------------------------------
def domain_adversarial_loss_forward(f_s, f_t, alpha, ns, params, *, tile_b=512):
    """Forward pass of DomainAdversarialLoss: (d_s, d_t, d_label_s, d_label_t)."""
    ns = int(ns)  # static split index, matching d[:ns] / d[ns:] in PyTorch
    alpha = jnp.asarray(alpha, jnp.float32)
    # Concat once (as in the PyTorch module); casting each half to bf16 fuses
    # into the concat copy, so the fused kernel reads half the feature bytes.
    f = jnp.concatenate((f_s.astype(jnp.bfloat16), f_t.astype(jnp.bfloat16)),
                        axis=0)
    # GRL: identity in forward; custom_vjp encodes the -alpha gradient scaling.
    f = gradient_reverse(f, alpha)
    # TODO(synk): the Pallas discriminator has no backward kernel, so gradients
    # do not flow through pallas_call; only forward semantics are implemented.
    d = run_discriminator(f, params, tile_b=tile_b)  # single fused call
    d_s = d[:ns]
    d_t = d[ns:]
    d_label_s = jnp.ones((f_s.shape[0], 1), jnp.float32)
    d_label_t = jnp.zeros((f_t.shape[0], 1), jnp.float32)
    return d_s, d_t, d_label_s, d_label_t


# ---------------------------------------------------------------------------
# Parameter helpers.
# ---------------------------------------------------------------------------
def init_discriminator_params(key, in_features, hidden):
    """Synthetic discriminator weights (Linear weights stored as (in, out))."""
    k1, k2, k3, k4, k5, k6 = jax.random.split(key, 6)
    w1 = jax.random.normal(k1, (in_features, hidden), jnp.float32) / jnp.sqrt(in_features)
    b1 = 0.1 * jax.random.normal(k4, (hidden,), jnp.float32)
    w2 = jax.random.normal(k2, (hidden, hidden), jnp.float32) / jnp.sqrt(hidden)
    b2 = 0.1 * jax.random.normal(k5, (hidden,), jnp.float32)
    w3 = jax.random.normal(k3, (hidden, 1), jnp.float32) / jnp.sqrt(hidden)
    b3 = 0.1 * jax.random.normal(k6, (), jnp.float32)
    return w1, b1, w2, b2, w3, b3


def prepare_discriminator_params(w1, b1, w2, b2, w3, b3):
    """Cast/lay out params for the kernel: bf16 MXU weights, f32 biases,
    w3 as a (1, H) row, b3 as a (1, 1) SMEM scalar."""
    return (
        w1.astype(jnp.bfloat16),
        b1.reshape(1, -1).astype(jnp.float32),
        w2.astype(jnp.bfloat16),
        b2.reshape(1, -1).astype(jnp.float32),
        w3.reshape(1, -1).astype(jnp.float32),
        jnp.asarray(b3, jnp.float32).reshape(1, 1),
    )


# ---------------------------------------------------------------------------
# Demo / self-test.
# ---------------------------------------------------------------------------
if __name__ == "__main__":
    key = jax.random.PRNGKey(0)
    k_params, k_fs, k_ft = jax.random.split(key, 3)

    # Small, lane-aligned shapes.  ns+nt = 65 exercises both the >=2-step grid
    # split and the partial (masked) last block without any wrapper-side pad.
    ns, nt = 40, 25
    in_features, hidden = 128, 128

    raw_params = init_discriminator_params(k_params, in_features, hidden)
    params = prepare_discriminator_params(*raw_params)

    f_s = jax.random.normal(k_fs, (ns, in_features), jnp.float32)
    f_t = jax.random.normal(k_ft, (nt, in_features), jnp.float32)
    alpha = 1.0

    fwd = jax.jit(functools.partial(domain_adversarial_loss_forward,
                                    ns=ns, tile_b=512))
    d_s, d_t, d_label_s, d_label_t = fwd(f_s, f_t, alpha, params=params)
    jax.block_until_ready((d_s, d_t, d_label_s, d_label_t))

    # Pure-JAX f32 reference (kernel uses bf16 features/weights => loose tol).
    w1, b1, w2, b2, w3, b3 = raw_params
    f = jnp.concatenate((f_s, f_t), axis=0)
    h1 = jnp.maximum(f @ w1 + b1, 0.0)
    h2 = jnp.maximum(h1 @ w2 + b2, 0.0)
    d_full = jax.nn.sigmoid(h2 @ w3 + b3)

    assert d_s.shape == (ns, 1) and d_t.shape == (nt, 1)
    assert d_label_s.shape == (ns, 1) and d_label_t.shape == (nt, 1)
    assert jnp.all(d_label_s == 1.0) and jnp.all(d_label_t == 0.0)
    assert jnp.allclose(d_s, d_full[:ns], atol=4e-2, rtol=0)
    assert jnp.allclose(d_t, d_full[ns:], atol=4e-2, rtol=0)

    print("KERNEL_OK")
</pallas_src>

<mosaic_0001>
module attributes {stable_mosaic.version = 11 : i64} {
  func.func @_discriminator_kernel(%arg0: i32, %arg1: memref<40x128xbf16, #tpu.memory_space<vmem>>, %arg2: memref<128x128xbf16, #tpu.memory_space<vmem>>, %arg3: memref<1x128xf32, #tpu.memory_space<vmem>>, %arg4: memref<128x128xbf16, #tpu.memory_space<vmem>>, %arg5: memref<1x128xf32, #tpu.memory_space<vmem>>, %arg6: memref<1x128xf32, #tpu.memory_space<vmem>>, %arg7: memref<1x1xf32, #tpu.memory_space<smem>>, %arg8: memref<40x1xf32, #tpu.memory_space<vmem>>) attributes {dimension_semantics = [#tpu.dimension_semantics<parallel>], iteration_bounds = array<i64: 2>, scalar_prefetch = 0 : i64, scratch_operands = 0 : i64, tpu.core_type = #tpu.core_type<tc>, window_params = [{transform_indices = @transform_0, window_bounds = array<i64: 40, 128>}, {pipeline_mode = #tpu.pipeline_mode<synchronous>, transform_indices = @transform_1, window_bounds = array<i64: 128, 128>}, {pipeline_mode = #tpu.pipeline_mode<synchronous>, transform_indices = @transform_2, window_bounds = array<i64: 1, 128>}, {pipeline_mode = #tpu.pipeline_mode<synchronous>, transform_indices = @transform_3, window_bounds = array<i64: 128, 128>}, {pipeline_mode = #tpu.pipeline_mode<synchronous>, transform_indices = @transform_4, window_bounds = array<i64: 1, 128>}, {pipeline_mode = #tpu.pipeline_mode<synchronous>, transform_indices = @transform_5, window_bounds = array<i64: 1, 128>}, {transform_indices = @transform_6, window_bounds = array<i64: 1, 1>}, {transform_indices = @transform_7, window_bounds = array<i64: 40, 1>}]} {
    %c0 = arith.constant 0 : index
    %c0_0 = arith.constant 0 : index
    %0 = vector.load %arg1[%c0, %c0_0] : memref<40x128xbf16, #tpu.memory_space<vmem>>, vector<40x128xbf16>
    %c0_1 = arith.constant 0 : index
    %c0_2 = arith.constant 0 : index
    %1 = vector.load %arg2[%c0_1, %c0_2] : memref<128x128xbf16, #tpu.memory_space<vmem>>, vector<128x128xbf16>
    %cst = arith.constant dense<0.000000e+00> : vector<40x128xf32>
    %2 = tpu.matmul %0, %1, %cst {dimension_numbers = #tpu.dot_dimension_numbers<[1], [0], [0], [1], [0, 0, 1, 1], [], []>} : vector<40x128xbf16>, vector<128x128xbf16>, vector<40x128xf32> -> vector<40x128xf32>
    %c0_3 = arith.constant 0 : index
    %c0_4 = arith.constant 0 : index
    %3 = vector.load %arg3[%c0_3, %c0_4] : memref<1x128xf32, #tpu.memory_space<vmem>>, vector<1x128xf32>
    %4 = vector.broadcast %3 : vector<1x128xf32> to vector<40x128xf32>
    %5 = arith.addf %2, %4 : vector<40x128xf32>
    %cst_5 = arith.constant 0.000000e+00 : f32
    %6 = vector.broadcast %cst_5 : f32 to vector<40x128xf32>
    %7 = arith.maximumf %5, %6 : vector<40x128xf32>
    %8 = arith.truncf %7 : vector<40x128xf32> to vector<40x128xbf16>
    %c0_6 = arith.constant 0 : index
    %c0_7 = arith.constant 0 : index
    %9 = vector.load %arg4[%c0_6, %c0_7] : memref<128x128xbf16, #tpu.memory_space<vmem>>, vector<128x128xbf16>
    %cst_8 = arith.constant dense<0.000000e+00> : vector<40x128xf32>
    %10 = tpu.matmul %8, %9, %cst_8 {dimension_numbers = #tpu.dot_dimension_numbers<[1], [0], [0], [1], [0, 0, 1, 1], [], []>} : vector<40x128xbf16>, vector<128x128xbf16>, vector<40x128xf32> -> vector<40x128xf32>
    %c0_9 = arith.constant 0 : index
    %c0_10 = arith.constant 0 : index
    %11 = vector.load %arg5[%c0_9, %c0_10] : memref<1x128xf32, #tpu.memory_space<vmem>>, vector<1x128xf32>
    %12 = vector.broadcast %11 : vector<1x128xf32> to vector<40x128xf32>
    %13 = arith.addf %10, %12 : vector<40x128xf32>
    %cst_11 = arith.constant 0.000000e+00 : f32
    %14 = vector.broadcast %cst_11 : f32 to vector<40x128xf32>
    %15 = arith.maximumf %13, %14 : vector<40x128xf32>
    %c0_12 = arith.constant 0 : index
    %c0_13 = arith.constant 0 : index
    %16 = vector.load %arg6[%c0_12, %c0_13] : memref<1x128xf32, #tpu.memory_space<vmem>>, vector<1x128xf32>
    %17 = vector.broadcast %16 : vector<1x128xf32> to vector<40x128xf32>
    %18 = arith.mulf %15, %17 : vector<40x128xf32>
    %cst_14 = arith.constant dense<0.000000e+00> : vector<40xf32>
    %19 = vector.multi_reduction <add>, %18, %cst_14 [1] : vector<40x128xf32> to vector<40xf32>
    %20 = vector.shape_cast %19 : vector<40xf32> to vector<40x1xf32>
    %c0_15 = arith.constant 0 : index
    %c0_16 = arith.constant 0 : index
    %21 = memref.load %arg7[%c0_15, %c0_16] : memref<1x1xf32, #tpu.memory_space<smem>>
    %22 = vector.broadcast %21 : f32 to vector<40x1xf32>
    %23 = arith.addf %20, %22 : vector<40x1xf32>
    %24 = arith.negf %23 : vector<40x1xf32>
    %25 = math.exp %24 : vector<40x1xf32>
    %cst_17 = arith.constant 1.000000e+00 : f32
    %26 = vector.broadcast %cst_17 : f32 to vector<40x1xf32>
    %27 = arith.addf %26, %25 : vector<40x1xf32>
    %28 = arith.divf %26, %27 : vector<40x1xf32>
    %c0_18 = arith.constant 0 : index
    %c0_19 = arith.constant 0 : index
    %29 = vector.load %arg8[%c0_18, %c0_19] : memref<40x1xf32, #tpu.memory_space<vmem>>, vector<40x1xf32>
    tpu.vector_store %arg8[%c0_18, %c0_19], %28 {strides = array<i32>} : memref<40x1xf32, #tpu.memory_space<vmem>>, vector<40x1xf32>,
    return
  }
  func.func @transform_0(%arg0: i32) -> (i32, i32) {
    %c0_i32 = arith.constant 0 : i32
    %c0_i32_0 = arith.constant 0 : i32
    return %arg0, %c0_i32 : i32, i32
  }
  func.func @transform_1(%arg0: i32) -> (i32, i32) {
    %c0_i32 = arith.constant 0 : i32
    %c0_i32_0 = arith.constant 0 : i32
    %c0_i32_1 = arith.constant 0 : i32
    return %c0_i32, %c0_i32_0 : i32, i32
  }
  func.func @transform_2(%arg0: i32) -> (i32, i32) {
    %c0_i32 = arith.constant 0 : i32
    %c0_i32_0 = arith.constant 0 : i32
    %c0_i32_1 = arith.constant 0 : i32
    return %c0_i32, %c0_i32_0 : i32, i32
  }
  func.func @transform_3(%arg0: i32) -> (i32, i32) {
    %c0_i32 = arith.constant 0 : i32
    %c0_i32_0 = arith.constant 0 : i32
    %c0_i32_1 = arith.constant 0 : i32
    return %c0_i32, %c0_i32_0 : i32, i32
  }
  func.func @transform_4(%arg0: i32) -> (i32, i32) {
    %c0_i32 = arith.constant 0 : i32
    %c0_i32_0 = arith.constant 0 : i32
    %c0_i32_1 = arith.constant 0 : i32
    return %c0_i32, %c0_i32_0 : i32, i32
  }
  func.func @transform_5(%arg0: i32) -> (i32, i32) {
    %c0_i32 = arith.constant 0 : i32
    %c0_i32_0 = arith.constant 0 : i32
    %c0_i32_1 = arith.constant 0 : i32
    return %c0_i32, %c0_i32_0 : i32, i32
  }
  func.func @transform_6(%arg0: i32) -> (i32, i32) {
    %c0_i32 = arith.constant 0 : i32
    %c0_i32_0 = arith.constant 0 : i32
    %c0_i32_1 = arith.constant 0 : i32
    return %c0_i32, %c0_i32_0 : i32, i32
  }
  func.func @transform_7(%arg0: i32) -> (i32, i32) {
    %c0_i32 = arith.constant 0 : i32
    %c0_i32_0 = arith.constant 0 : i32
    return %arg0, %c0_i32 : i32, i32
  }
}

</mosaic_0001>

<llo_original>
// kernel: domain_adversarial_loss_forward.1
$region0: #{domain_adversarial_loss_forward.1}
  #allocation0 [shape = 'u32[]', space=smem, size = 0x4, offset = 0x4, fixed_abs, tag = 'smem constant byte address 0x4 - core index']
  #allocation1 [shape = 'u32[144,128]{1,0:T(1,128)}', space=vmem, size = 0x12000, scoped, tag = 'internal scratch']
  #allocation2 [shape = 'f32[1,1]{1,0:T(1,128)S(6)}', space=smem, size = 0x200, scoped, tag = 'scoped memory for domain_adversarial_loss_forward.1']
  %s0 = inlined_call_operand.vmem [shape: bf16[65,128], index: 0, kind: input, shape index: {}]
  %s1 = inlined_call_operand.vmem [shape: bf16[128,128], index: 1, kind: input, shape index: {}]
  %s2 = inlined_call_operand.vmem [shape: f32[1,128], index: 2, kind: input, shape index: {}]
  %s3 = inlined_call_operand.vmem [shape: bf16[128,128], index: 3, kind: input, shape index: {}]
  %s4 = inlined_call_operand.vmem [shape: f32[1,128], index: 4, kind: input, shape index: {}]
  %s5 = inlined_call_operand.vmem [shape: f32[1,128], index: 5, kind: input, shape index: {}]
  %s6 = inlined_call_operand.<no memory space> [shape: f32[1,1], index: 6, kind: input, shape index: {}]
  %s7 = inlined_call_operand.vmem [shape: f32[65,1], index: 7, kind: output, shape index: {}]
  %s8 = sld [smem:[#allocation0]]
  $region109: #{domain_adversarial_loss_forward.1} parent=0
    _
  %s10 = ssub.s32 1, %s8
  %s11 = scalar_select 0, %s10, %s8
  %12 = sst [smem:[#allocation2]] %s6
  $region1: #{domain_adversarial_loss_forward.1} parent=0
    #allocation3 [shape = 'u8[40960]{0}', space=vmem, size = 0xa000, scoped, tag = 'output window, operand 0']
    loop: start=0, step=1, limit=4
    $region2: #{domain_adversarial_loss_forward.1} parent=1 // loop_pre_header
      _
    $region3: #{domain_adversarial_loss_forward.1} parent=1 // loop_header
      %s14 = sphi 0, %s18
      %p15 = scmp.ge.s32.totalorder %s14, 4
      %s24 = sphi 0, %s26
      %s27 = sphi 0, %s24
      %s28 = sphi 0, %s27
      %s44 = sphi 0, %s28
      %s48 = sphi 0, %s48
      %s50 = sphi 0, %s48
      %s51 = sphi 0, %s50
      %s65 = sphi 0, %s51
      %s69 = sphi 0, %s69
      %s71 = sphi 0, %s69
      %s72 = sphi 0, %s71
      %s86 = sphi 0, %s72
      %s90 = sphi 0, %s90
      %s92 = sphi 0, %s90
      %s93 = sphi 0, %s92
      %s107 = sphi 0, %s93
      %s111 = sphi 0, %s111
      %s113 = sphi 0, %s111
      %s114 = sphi 0, %s113
      %s128 = sphi 0, %s114
      %s132 = sphi 0, %s132
      %s134 = sphi 0, %s132
      %s135 = sphi 0, %s134
      %s149 = sphi 0, %s135
      %s153 = sphi 0, %s153
      %s155 = sphi 0, %s153
      %s156 = sphi 0, %s155
      %s170 = sphi 0, %s156
      %s176 = sphi 0, %s178
      %s179 = sphi 0, %s176
      %s180 = sphi 0, %s179
      %s196 = sphi 0, %s180
    $region4: #{domain_adversarial_loss_forward.1} parent=1 // loop_header_branch
      %17 = sbr.rel (%p15) target = $region8
    $region5: #{domain_adversarial_loss_forward.1} parent=1 // loop_body
      %s19 = ssub.s32 %s14, 1
      %s20 = ssub.s32 %s14, 2
      %s21 = sadd.s32 %s14, 1
      %s22 = ssub.s32 %s14, %s21
      %p23 = scmp.eq.s32.totalorder %s22, 0
      %s25 = sadd.s32 %s24, 1
      %s26 = scalar_select %p23, %s24, %s25
      %p29 = pneg %p23
      %p30 = scmp.eq.s32.totalorder %s14, 1
      %p31 = por %p29, %p30
      %p32 = scmp.ne.s32.totalorder %s24, %s27
      %p33 = scmp.eq.s32.totalorder %s14, 0
      %p34 = por %p32, %p33
      %p35 = scmp.ne.s32.totalorder %s24, %s27
      %p36 = scmp.eq.s32.totalorder %s19, 1
      %p37 = por %p35, %p36
      %p38 = scmp.ne.s32.totalorder %s27, %s28
      %p39 = scmp.eq.s32.totalorder %s19, 0
      %p40 = por %p38, %p39
      %p41 = scmp.ne.s32.totalorder %s27, %s28
      %p42 = scmp.eq.s32.totalorder %s20, 1
      %p43 = por %p41, %p42
      %p45 = scmp.ne.s32.totalorder %s28, %s44
      %p46 = scmp.eq.s32.totalorder %s20, 0
      %p47 = por %p45, %p46
      %s49 = sadd.s32 %s48, 1
      %p52 = scmp.eq.s32.totalorder %s14, 1
      %p53 = scmp.ne.s32.totalorder %s48, %s50
      %p54 = scmp.eq.s32.totalorder %s14, 0
      %p55 = por %p53, %p54
      %p56 = scmp.ne.s32.totalorder %s48, %s50
      %p57 = scmp.eq.s32.totalorder %s19, 1
      %p58 = por %p56, %p57
      %p59 = scmp.ne.s32.totalorder %s50, %s51
      %p60 = scmp.eq.s32.totalorder %s19, 0
      %p61 = por %p59, %p60
      %p62 = scmp.ne.s32.totalorder %s50, %s51
      %p63 = scmp.eq.s32.totalorder %s20, 1
      %p64 = por %p62, %p63
      %p66 = scmp.ne.s32.totalorder %s51, %s65
      %p67 = scmp.eq.s32.totalorder %s20, 0
      %p68 = por %p66, %p67
      %s70 = sadd.s32 %s69, 1
      %p73 = scmp.eq.s32.totalorder %s14, 1
      %p74 = scmp.ne.s32.totalorder %s69, %s71
      %p75 = scmp.eq.s32.totalorder %s14, 0
      %p76 = por %p74, %p75
      %p77 = scmp.ne.s32.totalorder %s69, %s71
      %p78 = scmp.eq.s32.totalorder %s19, 1
      %p79 = por %p77, %p78
      %p80 = scmp.ne.s32.totalorder %s71, %s72
      %p81 = scmp.eq.s32.totalorder %s19, 0
      %p82 = por %p80, %p81
      %p83 = scmp.ne.s32.totalorder %s71, %s72
      %p84 = scmp.eq.s32.totalorder %s20, 1
      %p85 = por %p83, %p84
      %p87 = scmp.ne.s32.totalorder %s72, %s86
      %p88 = scmp.eq.s32.totalorder %s20, 0
      %p89 = por %p87, %p88
      %s91 = sadd.s32 %s90, 1
      %p94 = scmp.eq.s32.totalorder %s14, 1
      %p95 = scmp.ne.s32.totalorder %s90, %s92
      %p96 = scmp.eq.s32.totalorder %s14, 0
      %p97 = por %p95, %p96
      %p98 = scmp.ne.s32.totalorder %s90, %s92
      %p99 = scmp.eq.s32.totalorder %s19, 1
      %p100 = por %p98, %p99
      %p101 = scmp.ne.s32.totalorder %s92, %s93
      %p102 = scmp.eq.s32.totalorder %s19, 0
      %p103 = por %p101, %p102
      %p104 = scmp.ne.s32.totalorder %s92, %s93
      %p105 = scmp.eq.s32.totalorder %s20, 1
      %p106 = por %p104, %p105
      %p108 = scmp.ne.s32.totalorder %s93, %s107
      %p109 = scmp.eq.s32.totalorder %s20, 0
      %p110 = por %p108, %p109
      %s112 = sadd.s32 %s111, 1
      %p115 = scmp.eq.s32.totalorder %s14, 1
      %p116 = scmp.ne.s32.totalorder %s111, %s113
      %p117 = scmp.eq.s32.totalorder %s14, 0
      %p118 = por %p116, %p117
      %p119 = scmp.ne.s32.totalorder %s111, %s113
      %p120 = scmp.eq.s32.totalorder %s19, 1
      %p121 = por %p119, %p120
      %p122 = scmp.ne.s32.totalorder %s113, %s114
      %p123 = scmp.eq.s32.totalorder %s19, 0
      %p124 = por %p122, %p123
      %p125 = scmp.ne.s32.totalorder %s113, %s114
      %p126 = scmp.eq.s32.totalorder %s20, 1
      %p127 = por %p125, %p126
      %p129 = scmp.ne.s32.totalorder %s114, %s128
      %p130 = scmp.eq.s32.totalorder %s20, 0
      %p131 = por %p129, %p130
      %s133 = sadd.s32 %s132, 1
      %p136 = scmp.eq.s32.totalorder %s14, 1
      %p137 = scmp.ne.s32.totalorder %s132, %s134
      %p138 = scmp.eq.s32.totalorder %s14, 0
      %p139 = por %p137, %p138
      %p140 = scmp.ne.s32.totalorder %s132, %s134
      %p141 = scmp.eq.s32.totalorder %s19, 1
      %p142 = por %p140, %p141
      %p143 = scmp.ne.s32.totalorder %s134, %s135
      %p144 = scmp.eq.s32.totalorder %s19, 0
      %p145 = por %p143, %p144
      %p146 = scmp.ne.s32.totalorder %s134, %s135
      %p147 = scmp.eq.s32.totalorder %s20, 1
      %p148 = por %p146, %p147
      %p150 = scmp.ne.s32.totalorder %s135, %s149
      %p151 = scmp.eq.s32.totalorder %s20, 0
      %p152 = por %p150, %p151
      %s154 = sadd.s32 %s153, 1
      %p157 = scmp.eq.s32.totalorder %s14, 1
      %p158 = scmp.ne.s32.totalorder %s153, %s155
      %p159 = scmp.eq.s32.totalorder %s14, 0
      %p160 = por %p158, %p159
      %p161 = scmp.ne.s32.totalorder %s153, %s155
      %p162 = scmp.eq.s32.totalorder %s19, 1
      %p163 = por %p161, %p162
      %p164 = scmp.ne.s32.totalorder %s155, %s156
      %p165 = scmp.eq.s32.totalorder %s19, 0
      %p166 = por %p164, %p165
      %p167 = scmp.ne.s32.totalorder %s155, %s156
      %p168 = scmp.eq.s32.totalorder %s20, 1
      %p169 = por %p167, %p168
      %p171 = scmp.ne.s32.totalorder %s156, %s170
      %p172 = scmp.eq.s32.totalorder %s20, 0
      %p173 = por %p171, %p172
      %s174 = ssub.s32 %s14, %s21
      %p175 = scmp.eq.s32.totalorder %s174, 0
      %s177 = sadd.s32 %s176, 1
      %s178 = scalar_select %p175, %s176, %s177
      %p181 = pneg %p175
      %p182 = scmp.eq.s32.totalorder %s14, 1
      %p183 = por %p181, %p182
      %p184 = scmp.ne.s32.totalorder %s176, %s179
      %p185 = scmp.eq.s32.totalorder %s14, 0
      %p186 = por %p184, %p185
      %p187 = scmp.ne.s32.totalorder %s176, %s179
      %p188 = scmp.eq.s32.totalorder %s19, 1
      %p189 = por %p187, %p188
      %p190 = scmp.ne.s32.totalorder %s179, %s180
      %p191 = scmp.eq.s32.totalorder %s19, 0
      %p192 = por %p190, %p191
      %p193 = scmp.ne.s32.totalorder %s179, %s180
      %p194 = scmp.eq.s32.totalorder %s20, 1
      %p195 = por %p193, %p194
      %p197 = scmp.ne.s32.totalorder %s180, %s196
      %p198 = scmp.eq.s32.totalorder %s20, 0
      %p199 = por %p197, %p198
      %p200 = scmp.le.s32.totalorder 1, %s14
      %p201 = scmp.lt.s32.totalorder %s14, 3
      %p202 = pnand %p200, %p201
      %p203 = pneg %p202
      // Predicated region
      $region9: #{domain_adversarial_loss_forward.1} parent=5 // pred_check
        _
      $region10: #{domain_adversarial_loss_forward.1} parent=5 // pred_check_branch
        %205 = sbr.rel (%p202) target = $region12
      $region11: #{domain_adversarial_loss_forward.1} parent=5 // pred_region
        %s206 = ssub.s32 %s14, 1
        // Predicated region
        $region13: #{domain_adversarial_loss_forward.1} parent=11 // pred_check
          %p207 = pneg %p61
        $region14: #{domain_adversarial_loss_forward.1} parent=11 // pred_check_branch
          %209 = sbr.rel (%p207) target = $region16
        $region15: #{domain_adversarial_loss_forward.1} parent=11 // pred_region
          _
        $region16: #{domain_adversarial_loss_forward.1} parent=11 // pred_fallthru
          _
        // Predicated region
        $region17: #{domain_adversarial_loss_forward.1} parent=11 // pred_check
          %p210 = pneg %p82
        $region18: #{domain_adversarial_loss_forward.1} parent=11 // pred_check_branch
          %212 = sbr.rel (%p210) target = $region20
        $region19: #{domain_adversarial_loss_forward.1} parent=11 // pred_region
          _
        $region20: #{domain_adversarial_loss_forward.1} parent=11 // pred_fallthru
          _
        // Predicated region
        $region21: #{domain_adversarial_loss_forward.1} parent=11 // pred_check
          %p213 = pneg %p103
        $region22: #{domain_adversarial_loss_forward.1} parent=11 // pred_check_branch
          %215 = sbr.rel (%p213) target = $region24
        $region23: #{domain_adversarial_loss_forward.1} parent=11 // pred_region
          _
        $region24: #{domain_adversarial_loss_forward.1} parent=11 // pred_fallthru
          _
        // Predicated region
        $region25: #{domain_adversarial_loss_forward.1} parent=11 // pred_check
          %p216 = pneg %p124
        $region26: #{domain_adversarial_loss_forward.1} parent=11 // pred_check_branch
          %218 = sbr.rel (%p216) target = $region28
        $region27: #{domain_adversarial_loss_forward.1} parent=11 // pred_region
          _
        $region28: #{domain_adversarial_loss_forward.1} parent=11 // pred_fallthru
          _
        // Predicated region
        $region29: #{domain_adversarial_loss_forward.1} parent=11 // pred_check
          %p219 = pneg %p145
        $region30: #{domain_adversarial_loss_forward.1} parent=11 // pred_check_branch
          %221 = sbr.rel (%p219) target = $region32
        $region31: #{domain_adversarial_loss_forward.1} parent=11 // pred_region
          _
        $region32: #{domain_adversarial_loss_forward.1} parent=11 // pred_fallthru
          _
        // Predicated region
        $region33: #{domain_adversarial_loss_forward.1} parent=11 // pred_check
          %p222 = pneg %p166
        $region34: #{domain_adversarial_loss_forward.1} parent=11 // pred_check_branch
          %224 = sbr.rel (%p222) target = $region36
        $region35: #{domain_adversarial_loss_forward.1} parent=11 // pred_region
          _
        $region36: #{domain_adversarial_loss_forward.1} parent=11 // pred_fallthru
          _
      $region12: #{domain_adversarial_loss_forward.1} parent=5 // pred_fallthru
        _
      %p225 = scmp.lt.s32.totalorder %s14, 2
      // Predicated region
      $region37: #{domain_adversarial_loss_forward.1} parent=5 // pred_check
        %p226 = pneg %p225
      $region38: #{domain_adversarial_loss_forward.1} parent=5 // pred_check_branch
        %228 = sbr.rel (%p226) target = $region40
      $region39: #{domain_adversarial_loss_forward.1} parent=5 // pred_region
        // Predicated region
        $region41: #{domain_adversarial_loss_forward.1} parent=39 // pred_check
          %p229 = pneg %p34
        $region42: #{domain_adversarial_loss_forward.1} parent=39 // pred_check_branch
          %231 = sbr.rel (%p229) target = $region44
        $region43: #{domain_adversarial_loss_forward.1} parent=39 // pred_region
          %s232 = smul.u32 5, %s14
          %s233 = ssub.s32 9, %s232
          %p234 = scmp.lt.s32.totalorder %s233, 5
          %s235 = scalar_select %p234, %s233, 5
          %s236 = smul.u32 64, %s235
          %p237 = scmp.lt.s32.totalorder %s232, 8
          %s238 = scalar_select %p237, %s232, 8
          %s239 = smul.addr %s238, 4
          %s240 = scalar_lea.vmem %s0, %s239
          %s241 = smul.u32 5, %s14
          %s242 = ssub.s32 9, %s241
          %p243 = scmp.lt.s32.totalorder %s242, 5
          %s244 = scalar_select %p243, %s242, 5
          %s245 = smul.u32 64, %s244
        $region44: #{domain_adversarial_loss_forward.1} parent=39 // pred_fallthru
          _
      $region40: #{domain_adversarial_loss_forward.1} parent=5 // pred_fallthru
        _
      %p246 = scmp.le.s32.totalorder 1, %s14
      %p247 = scmp.lt.s32.totalorder %s14, 3
      %p248 = pnand %p246, %p247
      %p249 = pneg %p248
      // Predicated region
      $region45: #{domain_adversarial_loss_forward.1} parent=5 // pred_check
        _
      $region46: #{domain_adversarial_loss_forward.1} parent=5 // pred_check_branch
        %251 = sbr.rel (%p248) target = $region48
      $region47: #{domain_adversarial_loss_forward.1} parent=5 // pred_region
        %s252 = ssub.s32 %s14, 1
        %s253 = smul.u32 5, %s19
        %s254 = ssub.s32 9, %s253
        %p255 = scmp.lt.s32.totalorder %s254, 5
        %s256 = scalar_select %p255, %s254, 5
        %s257 = smul.u32 64, %s256
        %p258 = scmp.lt.s32.totalorder %s253, 8
        %s259 = scalar_select %p258, %s253, 8
        %s260 = smul.addr %s259, 4
        %s261 = scalar_lea.vmem %s0, %s260
        %p262 = pneg %p40
        %p263 = pneg %p37
        %p264 = pneg %p61
        %p265 = pneg %p58
        %p266 = pneg %p82
        %p267 = pneg %p79
        %p268 = pneg %p103
        %p269 = pneg %p100
        %p270 = pneg %p124
        %p271 = pneg %p121
        %p272 = pneg %p145
        %p273 = pneg %p142
        %p274 = pneg %p166
        %p275 = pneg %p163
        %p276 = pneg %p192
        %p277 = pneg %p189
        %s278 = sand.u32 %s179, 1
        %s279 = sand.u32 %s179, 1
        %s280 = smul.addr %s279, 40
        %s281 = scalar_lea.vmem [#allocation3], %s280
        %s282 = smul.u32 5, %s19
        %s283 = ssub.s32 9, %s282
        %p284 = scmp.lt.s32.totalorder %s283, 5
        %s285 = scalar_select %p284, %s283, 5
        %s286 = smul.u32 64, %s285
        %p287 = scmp.lt.s32.totalorder %s282, 8
        %s288 = scalar_select %p287, %s282, 8
        %s289 = smul.addr %s288, 4
        %s290 = scalar_lea.vmem %s0, %s289
        %s291 = smul.u32 5, %s19
        %s292 = ssub.s32 9, %s291
        %p293 = scmp.lt.s32.totalorder %s292, 5
        %s294 = scalar_select %p293, %s292, 5
        %s295 = smul.u32 64, %s294
        %s296 = smul.u32 5, %s19
        %s297 = ssub.s32 9, %s296
        %p298 = scmp.lt.s32.totalorder %s297, 5
        %s299 = scalar_select %p298, %s297, 5
        %s300 = smul.u32 128, %s299
        %v302 = vld [vmem:[%s290] sm:$0xf]
        %v303 = vld [vmem:[%s290 + $0x4] sm:$0xf]
        %v304 = vld [vmem:[%s290 + $0x8] sm:$0xf]
        %v305 = vld [vmem:[%s290 + $0xc] sm:$0xf]
        %v306 = vld [vmem:[%s290 + $0x10] sm:$0xf]
        %v307 = vld [vmem:[%s1] sm:$0xf]
        %v308 = vld [vmem:[%s1 + $0x4] sm:$0xf]
        %v309 = vld [vmem:[%s1 + $0x8] sm:$0xf]
        %v310 = vld [vmem:[%s1 + $0xc] sm:$0xf]
        %v311 = vld [vmem:[%s1 + $0x10] sm:$0xf]
        %v312 = vld [vmem:[%s1 + $0x14] sm:$0xf]
        %v313 = vld [vmem:[%s1 + $0x18] sm:$0xf]
        %v314 = vld [vmem:[%s1 + $0x1c] sm:$0xf]
        %v315 = vld [vmem:[%s1 + $0x20] sm:$0xf]
        %v316 = vld [vmem:[%s1 + $0x24] sm:$0xf]
        %v317 = vld [vmem:[%s1 + $0x28] sm:$0xf]
        %v318 = vld [vmem:[%s1 + $0x2c] sm:$0xf]
        %v319 = vld [vmem:[%s1 + $0x30] sm:$0xf]
        %v320 = vld [vmem:[%s1 + $0x34] sm:$0xf]
        %v321 = vld [vmem:[%s1 + $0x38] sm:$0xf]
        %v322 = vld [vmem:[%s1 + $0x3c] sm:$0xf]
        %v323 = vld [vmem:[%s2] sm:$0x1]
        %v325 = vlaneseq
        %v326 = vshrl.u32 %v325, 7
        %v327 = vsub.s32 0, %v326
        %v328 = vrot.slane %v323, %v327
        %v335 = vunpack.c.l.b16 %v302
        %v336 = vunpack.c.l.b16 %v303
        %v337 = vunpack.c.l.b16 %v304
        %v338 = vunpack.c.l.b16 %v305
        %v339 = vunpack.c.l.b16 %v306
        %v340 = vpack.c.b16 %v336, %v335
        %v341 = vpack.c.b16 %v338, %v337
        %v342 = vpack.c.b16 %v339, %v339
        %v362 = vunpack.c.l.b16 %v307
        %v363 = vunpack.c.l.b16 %v308
        %v364 = vunpack.c.l.b16 %v309
        %v365 = vunpack.c.l.b16 %v310
        %v366 = vunpack.c.l.b16 %v311
        %v367 = vunpack.c.l.b16 %v312
        %v368 = vunpack.c.l.b16 %v313
        %v369 = vunpack.c.l.b16 %v314
        %v370 = vunpack.c.l.b16 %v315
        %v371 = vunpack.c.l.b16 %v316
        %v372 = vunpack.c.l.b16 %v317
        %v373 = vunpack.c.l.b16 %v318
        %v374 = vunpack.c.l.b16 %v319
        %v375 = vunpack.c.l.b16 %v320
        %v376 = vunpack.c.l.b16 %v321
        %v377 = vunpack.c.l.b16 %v322
        %v378 = vpack.c.b16 %v363, %v362
        %v379 = vpack.c.b16 %v365, %v364
        %v380 = vpack.c.b16 %v367, %v366
        %v381 = vpack.c.b16 %v369, %v368
        %v382 = vpack.c.b16 %v371, %v370
        %v383 = vpack.c.b16 %v373, %v372
        %v384 = vpack.c.b16 %v375, %v374
        %v385 = vpack.c.b16 %v377, %v376
        %394 = vmatprep.subr.bf16.mxu0 0
        %395 = vmatpush1.bf16.msra.mxu0 %v378
        %396 = vmatprep.subr.bf16.mxu0 0
        %397 = vmatpush1.bf16.msra.mxu0 %v379
        %398 = vmatprep.subr.bf16.mxu0 0
        %399 = vmatpush1.bf16.msra.mxu0 %v380
        %400 = vmatprep.subr.bf16.mxu0 0
        %401 = vmatpush1.bf16.msra.mxu0 %v381
        %402 = vmatprep.subr.bf16.mxu0 0
        %403 = vmatpush1.bf16.msra.mxu0 %v382
        %404 = vmatprep.subr.bf16.mxu0 0
        %405 = vmatpush1.bf16.msra.mxu0 %v383
        %406 = vmatprep.subr.bf16.mxu0 0
        %407 = vmatpush1.bf16.msra.mxu0 %v384
        %408 = vmatprep.subr.bf16.mxu0 0
        %409 = vmatpush1.bf16.msra.mxu0 %v385
        %410 = vmatprep.subr.bf16.mxu0 0
        %411 = vmatpush1.bf16.msra.mxu0 0
        %412 = vmatprep.subr.bf16.mxu0 0
        %413 = vmatpush1.bf16.msra.mxu0 0
        %414 = vmatprep.subr.bf16.mxu0 0
        %415 = vmatpush1.bf16.msra.mxu0 0
        %416 = vmatprep.subr.bf16.mxu0 0
        %417 = vmatpush1.bf16.msra.mxu0 0
        %418 = vmatprep.subr.bf16.mxu0 0
        %419 = vmatpush1.bf16.msra.mxu0 0
        %420 = vmatprep.subr.bf16.mxu0 0
        %421 = vmatpush1.bf16.msra.mxu0 0
        %422 = vmatprep.subr.bf16.mxu0 0
        %423 = vmatpush1.bf16.msra.mxu0 0
        %424 = vmatprep.subr.bf16.mxu0 0
        %425 = vmatpush1.bf16.msra.mxu0 0
        %426 = vmatprep.mubr.bf16.mxu0 0
        %427 = vmatmul.mubr.bf16.gmra.mrb[0].mxu0 %v340
        %v428 = vpop.f32.mrb[0].mxu0
        %v429 = vadd.f32 %v328, %v428
        %v430 = vpop.f32.mrb[0].mxu0
        %v431 = vpop.f32.mrb[0].mxu0
        %v432 = vadd.f32 %v328, %v431
        %v433 = vpop.f32.mrb[0].mxu0
        %434 = vmatprep.mubr.bf16.mxu0 0
        %435 = vmatmul.mubr.bf16.gmra.mrb[0].mxu0 %v341
        %v436 = vpop.f32.mrb[0].mxu0
        %v437 = vadd.f32 %v328, %v436
        %v438 = vpop.f32.mrb[0].mxu0
        %v439 = vpop.f32.mrb[0].mxu0
        %v440 = vadd.f32 %v328, %v439
        %v441 = vpop.f32.mrb[0].mxu0
        %442 = vmatprep.mubr.bf16.mxu0 0
        %443 = vmatmul.mubr.bf16.gmra.mrb[0].mxu0 %v342
        %v444 = vpop.f32.mrb[0].mxu0
        %v445 = vadd.f32 %v328, %v444
        %v446 = vpop.f32.mrb[0].mxu0
        %v447 = vpop.f32.mrb[0].mxu0
        %v448 = vpop.f32.mrb[0].mxu0
        %449 = vdwg.mxu0
        %v450 = vmax.f32 %v429, 0.0
        %v451 = vmax.f32 %v432, 0.0
        %v452 = vmax.f32 %v437, 0.0
        %v453 = vmax.f32 %v440, 0.0
        %v454 = vmax.f32 %v445, 0.0
        %v455 = vpack.c.bf16 %v451, %v450
        %v456 = vpack.c.bf16 %v453, %v452
        %v457 = vpack.c.bf16 %v454, %v454
        %v458 = vld [vmem:[%s3] sm:$0xf]
        %v459 = vld [vmem:[%s3 + $0x4] sm:$0xf]
        %v460 = vld [vmem:[%s3 + $0x8] sm:$0xf]
        %v461 = vld [vmem:[%s3 + $0xc] sm:$0xf]
        %v462 = vld [vmem:[%s3 + $0x10] sm:$0xf]
        %v463 = vld [vmem:[%s3 + $0x14] sm:$0xf]
        %v464 = vld [vmem:[%s3 + $0x18] sm:$0xf]
        %v465 = vld [vmem:[%s3 + $0x1c] sm:$0xf]
        %v466 = vld [vmem:[%s3 + $0x20] sm:$0xf]
        %v467 = vld [vmem:[%s3 + $0x24] sm:$0xf]
        %v468 = vld [vmem:[%s3 + $0x28] sm:$0xf]
        %v469 = vld [vmem:[%s3 + $0x2c] sm:$0xf]
        %v470 = vld [vmem:[%s3 + $0x30] sm:$0xf]
        %v471 = vld [vmem:[%s3 + $0x34] sm:$0xf]
        %v472 = vld [vmem:[%s3 + $0x38] sm:$0xf]
        %v473 = vld [vmem:[%s3 + $0x3c] sm:$0xf]
        %v474 = vld [vmem:[%s4] sm:$0x1]
        %v476 = vlaneseq
        %v477 = vshrl.u32 %v476, 7
        %v478 = vsub.s32 0, %v477
        %v479 = vrot.slane %v474, %v478
        %v497 = vunpack.c.l.b16 %v458
        %v498 = vunpack.c.l.b16 %v459
        %v499 = vunpack.c.l.b16 %v460
        %v500 = vunpack.c.l.b16 %v461
        %v501 = vunpack.c.l.b16 %v462
        %v502 = vunpack.c.l.b16 %v463
        %v503 = vunpack.c.l.b16 %v464
        %v504 = vunpack.c.l.b16 %v465
        %v505 = vunpack.c.l.b16 %v466
        %v506 = vunpack.c.l.b16 %v467
        %v507 = vunpack.c.l.b16 %v468
        %v508 = vunpack.c.l.b16 %v469
        %v509 = vunpack.c.l.b16 %v470
        %v510 = vunpack.c.l.b16 %v471
        %v511 = vunpack.c.l.b16 %v472
        %v512 = vunpack.c.l.b16 %v473
        %v513 = vpack.c.b16 %v498, %v497
        %v514 = vpack.c.b16 %v500, %v499
        %v515 = vpack.c.b16 %v502, %v501
        %v516 = vpack.c.b16 %v504, %v503
        %v517 = vpack.c.b16 %v506, %v505
        %v518 = vpack.c.b16 %v508, %v507
        %v519 = vpack.c.b16 %v510, %v509
        %v520 = vpack.c.b16 %v512, %v511
        %529 = vmatprep.subr.bf16.mxu0 0
        %530 = vmatpush1.bf16.msra.mxu0 %v513
        %531 = vmatprep.subr.bf16.mxu0 0
        %532 = vmatpush1.bf16.msra.mxu0 %v514
        %533 = vmatprep.subr.bf16.mxu0 0
        %534 = vmatpush1.bf16.msra.mxu0 %v515
        %535 = vmatprep.subr.bf16.mxu0 0
        %536 = vmatpush1.bf16.msra.mxu0 %v516
        %537 = vmatprep.subr.bf16.mxu0 0
        %538 = vmatpush1.bf16.msra.mxu0 %v517
        %539 = vmatprep.subr.bf16.mxu0 0
        %540 = vmatpush1.bf16.msra.mxu0 %v518
        %541 = vmatprep.subr.bf16.mxu0 0
        %542 = vmatpush1.bf16.msra.mxu0 %v519
        %543 = vmatprep.subr.bf16.mxu0 0
        %544 = vmatpush1.bf16.msra.mxu0 %v520
        %545 = vmatprep.subr.bf16.mxu0 0
        %546 = vmatpush1.bf16.msra.mxu0 0
        %547 = vmatprep.subr.bf16.mxu0 0
        %548 = vmatpush1.bf16.msra.mxu0 0
        %549 = vmatprep.subr.bf16.mxu0 0
        %550 = vmatpush1.bf16.msra.mxu0 0
        %551 = vmatprep.subr.bf16.mxu0 0
        %552 = vmatpush1.bf16.msra.mxu0 0
        %553 = vmatprep.subr.bf16.mxu0 0
        %554 = vmatpush1.bf16.msra.mxu0 0
        %555 = vmatprep.subr.bf16.mxu0 0
        %556 = vmatpush1.bf16.msra.mxu0 0
        %557 = vmatprep.subr.bf16.mxu0 0
        %558 = vmatpush1.bf16.msra.mxu0 0
        %559 = vmatprep.subr.bf16.mxu0 0
        %560 = vmatpush1.bf16.msra.mxu0 0
        %561 = vmatprep.mubr.bf16.mxu0 0
        %562 = vmatmul.mubr.bf16.gmra.mrb[0].mxu0 %v455
        %v563 = vpop.f32.mrb[0].mxu0
        %v564 = vadd.f32 %v479, %v563
        %v565 = vpop.f32.mrb[0].mxu0
        %v566 = vpop.f32.mrb[0].mxu0
        %v567 = vadd.f32 %v479, %v566
        %v568 = vpop.f32.mrb[0].mxu0
        %569 = vmatprep.mubr.bf16.mxu0 0
        %570 = vmatmul.mubr.bf16.gmra.mrb[0].mxu0 %v456
        %v571 = vpop.f32.mrb[0].mxu0
        %v572 = vadd.f32 %v479, %v571
        %v573 = vpop.f32.mrb[0].mxu0
        %v574 = vpop.f32.mrb[0].mxu0
        %v575 = vadd.f32 %v479, %v574
        %v576 = vpop.f32.mrb[0].mxu0
        %577 = vmatprep.mubr.bf16.mxu0 0
        %578 = vmatmul.mubr.bf16.gmra.mrb[0].mxu0 %v457
        %v579 = vpop.f32.mrb[0].mxu0
        %v580 = vadd.f32 %v479, %v579
        %v581 = vpop.f32.mrb[0].mxu0
        %v582 = vpop.f32.mrb[0].mxu0
        %v583 = vpop.f32.mrb[0].mxu0
        %584 = vdwg.mxu0
        %v585 = vmax.f32 %v564, 0.0
        %v586 = vmax.f32 %v567, 0.0
        %v587 = vmax.f32 %v572, 0.0
        %v588 = vmax.f32 %v575, 0.0
        %v589 = vmax.f32 %v580, 0.0
        %v590 = vld [vmem:[%s5] sm:$0x1]
        %v592 = vlaneseq
        %v593 = vshrl.u32 %v592, 7
        %v594 = vsub.s32 0, %v593
        %v595 = vrot.slane %v590, %v594
        %v597 = vmul.f32 %v585, %v595
        %v598 = vmul.f32 %v586, %v595
        %v599 = vmul.f32 %v587, %v595
        %v600 = vmul.f32 %v588, %v595
        %v601 = vmul.f32 %v589, %v595
        %602 = vadd.xlane.f32.xlu0 %v597
        %v603 = vpop.xlane.xlu0 %602
        %604 = vadd.xlane.f32.xlu0 %v598
        %v605 = vpop.xlane.xlu0 %604
        %606 = vadd.xlane.f32.xlu0 %v599
        %v607 = vpop.xlane.xlu0 %606
        %608 = vadd.xlane.f32.xlu0 %v600
        %v609 = vpop.xlane.xlu0 %608
        %610 = vadd.xlane.f32.xlu0 %v601
        %v611 = vpop.xlane.xlu0 %610
        %s612 = sld [smem:[#allocation2]]
        %v613 = vstv %s612
        %v614 = vadd.f32 %v603, %v613
        %v615 = vadd.f32 %v605, %v613
        %v616 = vadd.f32 %v607, %v613
        %v617 = vadd.f32 %v609, %v613
        %v618 = vadd.f32 %v611, %v613
        %v619 = vxor.u32 %v614, 2147483648
        %v620 = vxor.u32 %v615, 2147483648
        %v621 = vxor.u32 %v616, 2147483648
        %v622 = vxor.u32 %v617, 2147483648
        %v623 = vxor.u32 %v618, 2147483648
        %v624 = vmul.f32 %v619, 1.442695
        %v625 = vpow.pop %v624
        %v626 = vmul.f32 %v620, 1.442695
        %v627 = vpow.pop %v626
        %v628 = vmul.f32 %v621, 1.442695
        %v629 = vpow.pop %v628
        %v630 = vmul.f32 %v622, 1.442695
        %v631 = vpow.pop %v630
        %v632 = vmul.f32 %v623, 1.442695
        %v633 = vpow.pop %v632
        %v634 = vadd.f32 %v625, 1.0
        %v635 = vadd.f32 %v627, 1.0
        %v636 = vadd.f32 %v629, 1.0
        %v637 = vadd.f32 %v631, 1.0
        %v638 = vadd.f32 %v633, 1.0
        %v639 = vrcp.pop %v634
        %v640 = vmul.f32 1.0, %v639
        %v641 = vrcp.pop %v635
        %v642 = vmul.f32 1.0, %v641
        %v643 = vrcp.pop %v636
        %v644 = vmul.f32 1.0, %v643
        %v645 = vrcp.pop %v637
        %v646 = vmul.f32 1.0, %v645
        %v647 = vrcp.pop %v638
        %v648 = vmul.f32 1.0, %v647
        %vm649 = vcmask 7168
        %650 = vst.msk [vmem:[%s281] sm:$0xff] %vm649, %v640
        %651 = vst.msk [vmem:[%s281 + $0x8] sm:$0xff] %vm649, %v642
        %652 = vst.msk [vmem:[%s281 + $0x10] sm:$0xff] %vm649, %v644
        %653 = vst.msk [vmem:[%s281 + $0x18] sm:$0xff] %vm649, %v646
        %654 = vst.msk [vmem:[%s281 + $0x20] sm:$0xff] %vm649, %v648
        %s655 = sand.u32 %s179, 1
        %s656 = sand.u32 %s179, 1
        %s657 = smul.addr %s656, 40
        %s658 = scalar_lea.vmem [#allocation3], %s657
        // Predicated region
        $region49: #{domain_adversarial_loss_forward.1} parent=47 // pred_check
          %p659 = pneg %p189
        $region50: #{domain_adversarial_loss_forward.1} parent=47 // pred_check_branch
          %661 = sbr.rel (%p659) target = $region52
        $region51: #{domain_adversarial_loss_forward.1} parent=47 // pred_region
          %s662 = smul.u32 5, %s19
          %s663 = ssub.s32 9, %s662
          %p664 = scmp.lt.s32.totalorder %s663, 5
          %s665 = scalar_select %p664, %s663, 5
          %s666 = smul.u32 128, %s665
          %p667 = scmp.ne.s32.totalorder 0, %s666
          %s668 = smul.addr %s662, 8
          %s669 = scalar_lea.vmem %s7, %s668
          // Predicated region
          $region53: #{domain_adversarial_loss_forward.1} parent=51 // pred_check
            %p670 = pneg %p667
          $region54: #{domain_adversarial_loss_forward.1} parent=51 // pred_check_branch
            %672 = sbr.rel (%p670) target = $region56
          $region55: #{domain_adversarial_loss_forward.1} parent=51 // pred_region
            // Predicated region
            $region57: #{domain_adversarial_loss_forward.1} parent=55 // pred_check
              _
            $region58: #{domain_adversarial_loss_forward.1} parent=55 // pred_check_branch
              %674 = sbr.rel (0) target = $region60
            $region59: #{domain_adversarial_loss_forward.1} parent=55 // pred_region
              // Predicated region
              $region79: #{domain_adversarial_loss_forward.1} parent=59 // pred_check
                _
              $region80: #{domain_adversarial_loss_forward.1} parent=59 // pred_check_branch
                %732 = sbr.rel (0) target = $region82
              $region81: #{domain_adversarial_loss_forward.1} parent=59 // pred_region
                %s733 = sdiv.u32.pop %s665, 5
                %s734 = srem.u32.pop %s665, 5
                // While loop
                $region83: #{domain_adversarial_loss_forward.1} parent=81 // loop_pre_header
                  _
                $region84: #{domain_adversarial_loss_forward.1} parent=81 // loop_header
                  %s736 = sphi 0, %s738
                  %p737 = scmp.ge.s32.totalorder %s736, %s733
                  %s741 = sphi 0, %s756
                  %s742 = sphi %s658, %s759
                  %s743 = sphi %s669, %s760
                $region85: #{domain_adversarial_loss_forward.1} parent=81 // loop_header_branch
                  %740 = sbr.rel (%p737) target = $region89
                $region86: #{domain_adversarial_loss_forward.1} parent=81 // loop_body
                  %v744 = vld [vmem:[%s742] sm:$0xff]
                  %745 = vst [vmem:[%s743] sm:$0xff] %v744
                  %v746 = vld [vmem:[%s742 + $0x8] sm:$0xff]
                  %747 = vst [vmem:[%s743 + $0x8] sm:$0xff] %v746
                  %v748 = vld [vmem:[%s742 + $0x10] sm:$0xff]
                  %749 = vst [vmem:[%s743 + $0x10] sm:$0xff] %v748
                  %v750 = vld [vmem:[%s742 + $0x18] sm:$0xff]
                  %751 = vst [vmem:[%s743 + $0x18] sm:$0xff] %v750
                  %v752 = vld [vmem:[%s742 + $0x20] sm:$0xff]
                  %753 = vst [vmem:[%s743 + $0x20] sm:$0xff] %v752
                  %s754 = sadd.s32 1, %s741
                  %p755 = scmp.ge.s32.totalorder %s754, %s733
                  %s756 = scalar_select %p755, 0, %s754
                  %s757 = smul.u32 %s756, 40
                  %s758 = smul.u32 %s756, 40
                  %s759 = scalar_lea.vmem %s658, %s757 [#allocation3]
                  %s760 = scalar_lea.vmem %s669, %s758
                $region87: #{domain_adversarial_loss_forward.1} parent=81 // loop_footer
                  %s738 = sadd.s32 %s736, 1
                $region88: #{domain_adversarial_loss_forward.1} parent=81 // loop_footer_branch
                  %735 = sbr.rel target = $region84
                $region89: #{domain_adversarial_loss_forward.1} parent=81 // loop_exit
                  _
                %s761 = sdiv.u32.pop %s665, 5
                %s762 = srem.u32.pop %s665, 5
                %s763 = smul.u32 %s761, 5
                %s764 = smul.u32 8, %s763
                %s765 = scalar_lea.vmem %s658, %s764 [#allocation3]
                %s766 = smul.u32 8, %s763
                %s767 = scalar_lea.vmem %s669, %s766
                // While loop
                $region90: #{domain_adversarial_loss_forward.1} parent=81 // loop_pre_header
                  _
                $region91: #{domain_adversarial_loss_forward.1} parent=81 // loop_header
                  %s769 = sphi 0, %s771
                  %p770 = scmp.ge.s32.totalorder %s769, %s762
                  %s774 = sphi 0, %s781
                  %s775 = sphi %s765, %s784
                  %s776 = sphi %s767, %s785
                $region92: #{domain_adversarial_loss_forward.1} parent=81 // loop_header_branch
                  %773 = sbr.rel (%p770) target = $region96
                $region93: #{domain_adversarial_loss_forward.1} parent=81 // loop_body
                  %v777 = vld [vmem:[%s775] sm:$0xff]
                  %778 = vst [vmem:[%s776] sm:$0xff] %v777
                  %s779 = sadd.s32 1, %s774
                  %p780 = scmp.ge.s32.totalorder %s779, %s762
                  %s781 = scalar_select %p780, 0, %s779
                  %s782 = smul.u32 %s781, 8
                  %s783 = smul.u32 %s781, 8
                  %s784 = scalar_lea.vmem %s765, %s782 [#allocation3]
                  %s785 = scalar_lea.vmem %s767, %s783
                $region94: #{domain_adversarial_loss_forward.1} parent=81 // loop_footer
                  %s771 = sadd.s32 %s769, 1
                $region95: #{domain_adversarial_loss_forward.1} parent=81 // loop_footer_branch
                  %768 = sbr.rel target = $region91
                $region96: #{domain_adversarial_loss_forward.1} parent=81 // loop_exit
                  _
              $region82: #{domain_adversarial_loss_forward.1} parent=59 // pred_fallthru
                _
              // Predicated region
              $region97: #{domain_adversarial_loss_forward.1} parent=59 // pred_check
                _
              $region98: #{domain_adversarial_loss_forward.1} parent=59 // pred_check_branch
                %787 = sbr.rel target = $region100
              $region99: #{domain_adversarial_loss_forward.1} parent=59 // pred_region
                _
              $region100: #{domain_adversarial_loss_forward.1} parent=59 // pred_fallthru
                _
            $region60: #{domain_adversarial_loss_forward.1} parent=55 // pred_fallthru
              _
            // Predicated region
            $region61: #{domain_adversarial_loss_forward.1} parent=55 // pred_check
              _
            $region62: #{domain_adversarial_loss_forward.1} parent=55 // pred_check_branch
              %676 = sbr.rel target = $region64
            $region63: #{domain_adversarial_loss_forward.1} parent=55 // pred_region
              %s678 = sdiv.u32.pop %s665, 5
              %s679 = srem.u32.pop %s665, 5
              // While loop
              $region65: #{domain_adversarial_loss_forward.1} parent=63 // loop_pre_header
                _
              $region66: #{domain_adversarial_loss_forward.1} parent=63 // loop_header
                %s681 = sphi 0, %s683
                %p682 = scmp.ge.s32.totalorder %s681, %s678
                %s686 = sphi 0, %s701
                %s687 = sphi %s658, %s704
                %s688 = sphi %s669, %s705
              $region67: #{domain_adversarial_loss_forward.1} parent=63 // loop_header_branch
                %685 = sbr.rel (%p682) target = $region71
              $region68: #{domain_adversarial_loss_forward.1} parent=63 // loop_body
                %v689 = vld [vmem:[%s687] sm:$0xff]
                %690 = vst [vmem:[%s688] sm:$0xff] %v689
                %v691 = vld [vmem:[%s687 + $0x8] sm:$0xff]
                %692 = vst [vmem:[%s688 + $0x8] sm:$0xff] %v691
                %v693 = vld [vmem:[%s687 + $0x10] sm:$0xff]
                %694 = vst [vmem:[%s688 + $0x10] sm:$0xff] %v693
                %v695 = vld [vmem:[%s687 + $0x18] sm:$0xff]
                %696 = vst [vmem:[%s688 + $0x18] sm:$0xff] %v695
                %v697 = vld [vmem:[%s687 + $0x20] sm:$0xff]
                %698 = vst [vmem:[%s688 + $0x20] sm:$0xff] %v697
                %s699 = sadd.s32 1, %s686
                %p700 = scmp.ge.s32.totalorder %s699, %s678
                %s701 = scalar_select %p700, 0, %s699
                %s702 = smul.u32 %s701, 40
                %s703 = smul.u32 %s701, 40
                %s704 = scalar_lea.vmem %s658, %s702 [#allocation3]
                %s705 = scalar_lea.vmem %s669, %s703
              $region69: #{domain_adversarial_loss_forward.1} parent=63 // loop_footer
                %s683 = sadd.s32 %s681, 1
              $region70: #{domain_adversarial_loss_forward.1} parent=63 // loop_footer_branch
                %680 = sbr.rel target = $region66
              $region71: #{domain_adversarial_loss_forward.1} parent=63 // loop_exit
                _
              %s706 = sdiv.u32.pop %s665, 5
              %s707 = srem.u32.pop %s665, 5
              %s708 = smul.u32 %s706, 5
              %s709 = smul.u32 8, %s708
              %s710 = scalar_lea.vmem %s658, %s709 [#allocation3]
              %s711 = smul.u32 8, %s708
              %s712 = scalar_lea.vmem %s669, %s711
              // While loop
              $region72: #{domain_adversarial_loss_forward.1} parent=63 // loop_pre_header
                _
              $region73: #{domain_adversarial_loss_forward.1} parent=63 // loop_header
                %s714 = sphi 0, %s716
                %p715 = scmp.ge.s32.totalorder %s714, %s707
                %s719 = sphi 0, %s726
                %s720 = sphi %s710, %s729
                %s721 = sphi %s712, %s730
              $region74: #{domain_adversarial_loss_forward.1} parent=63 // loop_header_branch
                %718 = sbr.rel (%p715) target = $region78
              $region75: #{domain_adversarial_loss_forward.1} parent=63 // loop_body
                %v722 = vld [vmem:[%s720] sm:$0xff]
                %723 = vst [vmem:[%s721] sm:$0xff] %v722
                %s724 = sadd.s32 1, %s719
                %p725 = scmp.ge.s32.totalorder %s724, %s707
                %s726 = scalar_select %p725, 0, %s724
                %s727 = smul.u32 %s726, 8
                %s728 = smul.u32 %s726, 8
                %s729 = scalar_lea.vmem %s710, %s727 [#allocation3]
                %s730 = scalar_lea.vmem %s712, %s728
              $region76: #{domain_adversarial_loss_forward.1} parent=63 // loop_footer
                %s716 = sadd.s32 %s714, 1
              $region77: #{domain_adversarial_loss_forward.1} parent=63 // loop_footer_branch
                %713 = sbr.rel target = $region73
              $region78: #{domain_adversarial_loss_forward.1} parent=63 // loop_exit
                _
            $region64: #{domain_adversarial_loss_forward.1} parent=55 // pred_fallthru
              _
          $region56: #{domain_adversarial_loss_forward.1} parent=51 // pred_fallthru
            _
          %788 = vnop
        $region52: #{domain_adversarial_loss_forward.1} parent=47 // pred_fallthru
          _
      $region48: #{domain_adversarial_loss_forward.1} parent=5 // pred_fallthru
        _
      %p789 = scmp.le.s32.totalorder 2, %s14
      // Predicated region
      $region101: #{domain_adversarial_loss_forward.1} parent=5 // pred_check
        %p790 = pneg %p789
      $region102: #{domain_adversarial_loss_forward.1} parent=5 // pred_check_branch
        %792 = sbr.rel (%p790) target = $region104
      $region103: #{domain_adversarial_loss_forward.1} parent=5 // pred_region
        %s793 = ssub.s32 %s14, 2
        // Predicated region
        $region105: #{domain_adversarial_loss_forward.1} parent=103 // pred_check
          %p794 = pneg %p195
        $region106: #{domain_adversarial_loss_forward.1} parent=103 // pred_check_branch
          %796 = sbr.rel (%p794) target = $region108
        $region107: #{domain_adversarial_loss_forward.1} parent=103 // pred_region
          %s797 = sand.u32 %s180, 1
          %s798 = sand.u32 %s180, 1
          %s799 = smul.addr %s798, 40
          %s800 = scalar_lea.vmem [#allocation3], %s799
        $region108: #{domain_adversarial_loss_forward.1} parent=103 // pred_fallthru
          _
      $region104: #{domain_adversarial_loss_forward.1} parent=5 // pred_fallthru
        _
    $region6: #{domain_adversarial_loss_forward.1} parent=1 // loop_footer
      %s18 = sadd.s32 1, %s14
    $region7: #{domain_adversarial_loss_forward.1} parent=1 // loop_footer_branch
      %13 = sbr.rel target = $region3
    $region8: #{domain_adversarial_loss_forward.1} parent=1 // loop_exit
      _

</llo_original>
